<compile_context>
chip_gen: v6e
topology: v6e:2x2x1
jax: 0.10.0
libtpu: 0.0.40
codegen_flags: <defaults>
</compile_context>

<pallas_src>
import math

import jax
import jax.numpy as jnp
from jax.experimental import pallas as pl
from jax.experimental.pallas import tpu as pltpu


def _round_up(n, m):
    return ((n + m - 1) // m) * m


_LN_EPS = 1e-12  # nn.LayerNorm(d_model, eps=1e-12) in the PyTorch module


def _gelu_exact(h):
    # exact erf GELU (matches torch.nn.GELU default)
    return 0.5 * h * (1.0 + jax.lax.erf(h * (1.0 / math.sqrt(2.0))))


def _layer_norm(y, gamma, beta):
    # two-pass mean / variance: avoids E[y^2]-E[y]^2 cancellation, clamp >= 0
    mean = jnp.mean(y, axis=-1, keepdims=True)
    yc = y - mean
    var = jnp.maximum(jnp.mean(yc * yc, axis=-1, keepdims=True), 0.0)
    out = yc * jax.lax.rsqrt(var + _LN_EPS)
    return out * gamma + beta


# --------------------------------------------------------------------------
# Kernels
# --------------------------------------------------------------------------
def _ffn_kernel_resident(x_ref, w1_ref, b1_ref, w2_ref, b2_ref,
                         gamma_ref, beta_ref, o_ref):
    # Full weights resident in VMEM; single row-parallel grid axis.
    x = x_ref[...]
    h = jnp.dot(x, w1_ref[...], preferred_element_type=jnp.float32)
    h = _gelu_exact(h + b1_ref[...].astype(jnp.float32))
    # dropout -> identity (eval mode)
    y = jnp.dot(h.astype(w2_ref.dtype), w2_ref[...],
                preferred_element_type=jnp.float32)
    y = y + b2_ref[...].astype(jnp.float32) + x.astype(jnp.float32)
    y = _layer_norm(y, gamma_ref[...].astype(jnp.float32),
                    beta_ref[...].astype(jnp.float32))
    o_ref[...] = y.astype(o_ref.dtype)


def _ffn_kernel_stream(x_ref, w1_ref, b1_ref, w2_ref, b2_ref, gamma_ref,
                       beta_ref, o_ref, acc_ref):
    # x_ref: (rt, D)   w1_ref: (D, tI)  b1_ref: (1, tI)
    # w2_ref: (tI, D)  b2_ref/gamma/beta: (1, D)
    # acc_ref: (rt, D) f32 accumulator resident across the inner-dim grid axis
    k = pl.program_id(1)

    @pl.when(k == 0)
    def _():
        acc_ref[...] = jnp.zeros_like(acc_ref)

    h = jnp.dot(x_ref[...], w1_ref[...], preferred_element_type=jnp.float32)
    h = _gelu_exact(h + b1_ref[...].astype(jnp.float32))
    # dropout -> identity (eval mode)
    # TODO(synk): training-mode dropout would need pltpu.prng_seed / prng_random_bits.
    acc_ref[...] += jnp.dot(h.astype(w2_ref.dtype), w2_ref[...],
                            preferred_element_type=jnp.float32)

    @pl.when(k == pl.num_programs(1) - 1)
    def _():
        y = (acc_ref[...] + b2_ref[...].astype(jnp.float32)
             + x_ref[...].astype(jnp.float32))
        y = _layer_norm(y, gamma_ref[...].astype(jnp.float32),
                        beta_ref[...].astype(jnp.float32))
        o_ref[...] = y.astype(o_ref.dtype)


# --------------------------------------------------------------------------
# Per-generation tiling / VMEM budgets
# --------------------------------------------------------------------------
def _chip_config():
    kind = ""
    try:
        kind = jax.devices()[0].device_kind.lower()
    except Exception:
        pass
    if "v5 lite" in kind or "v5e" in kind or "v5litepod" in kind:
        # 197 TF/s, ~0.8 TB/s -> rt=256 already near the balance point.
        return dict(name="v5e", row_tile=256, inner_tiles=(256, 128),
                    vmem_cap=100 << 20)
    if "v6" in kind:
        # 918 TF/s, ~1.4 TB/s -> rt~768 to be MXU-bound; 128 MiB physical VMEM.
        return dict(name="v6e", row_tile=768, inner_tiles=(512, 256, 128),
                    vmem_cap=100 << 20)
    if "v7" in kind:
        # 64 MiB physical VMEM; 3.2 TB/s -> rt=512 compute-bound within ~48 MiB.
        return dict(name="v7x", row_tile=512, inner_tiles=(256, 128),
                    vmem_cap=48 << 20)
    # unknown / older generations -> conservative
    return dict(name="generic", row_tile=512, inner_tiles=(256, 128),
                vmem_cap=64 << 20)


# --------------------------------------------------------------------------
# Wrapper
# --------------------------------------------------------------------------
def feed_forward(x, params, *, row_tile=None, inner_tile=None, mode="auto"):
    """x: [B, S, d_model] -> [B, S, d_model].  mode: 'auto'|'resident'|'stream'."""
    B, S, D = x.shape
    w1, b1, w2, b2, gamma, beta = params
    I = w1.shape[1]

    N = B * S
    x2d = x.reshape(N, D)

    cfg = _chip_config()
    xb = jnp.dtype(x.dtype).itemsize
    wb = jnp.dtype(w1.dtype).itemsize

    # ---- row tile: per-chip default, clamped for small N, multiple of 16
    rt = row_tile if row_tile is not None else cfg["row_tile"]
    rt = min(rt, _round_up(N, 128))
    rt = max(16, _round_up(rt, 16))
    n_pad = _round_up(N, rt)
    if n_pad != N:
        x2d = jnp.pad(x2d, ((0, n_pad - N), (0, 0)))
    n_row_tiles = n_pad // rt

    # ---- path selection: hold full weights resident when they fit the budget
    resident_bytes = (4 * D * I * wb          # w1 + w2 (double-buffered slots)
                      + 4 * rt * D * xb       # x + out double buffers
                      + 6 * rt * I            # h temporaries (f32 + cast)
                      + 8 * (D + I) * wb)     # biases / LN params
    use_resident = resident_bytes <= int(0.8 * cfg["vmem_cap"])
    if mode == "resident":
        use_resident = True
    elif mode == "stream":
        use_resident = False

    if use_resident:
        # ------------------ fast path: no inner-dim grid axis ------------------
        vmem_limit = min(cfg["vmem_cap"],
                         max(32 << 20, int(resident_bytes * 1.25)))
        cost = pl.CostEstimate(
            flops=int(4 * n_pad * D * I),
            transcendentals=int(n_pad * I),
            bytes_accessed=int(2 * n_pad * D * xb        # x in + out
                               + 2 * D * I * wb          # weights read once
                               + (I + 3 * D) * wb),
        )
        out = pl.pallas_call(
            _ffn_kernel_resident,
            out_shape=jax.ShapeDtypeStruct((n_pad, D), x.dtype),
            grid_spec=pltpu.PrefetchScalarGridSpec(
                num_scalar_prefetch=0,
                grid=(n_row_tiles,),
                in_specs=[
                    pl.BlockSpec((rt, D), lambda i: (i, 0)),   # x rows
                    pl.BlockSpec((D, I), lambda i: (0, 0)),    # w1 (resident)
                    pl.BlockSpec((1, I), lambda i: (0, 0)),    # b1
                    pl.BlockSpec((I, D), lambda i: (0, 0)),    # w2 (resident)
                    pl.BlockSpec((1, D), lambda i: (0, 0)),    # b2
                    pl.BlockSpec((1, D), lambda i: (0, 0)),    # gamma
                    pl.BlockSpec((1, D), lambda i: (0, 0)),    # beta
                ],
                out_specs=pl.BlockSpec((rt, D), lambda i: (i, 0)),
            ),
            compiler_params=pltpu.CompilerParams(
                dimension_semantics=("parallel",),
                vmem_limit_bytes=vmem_limit),
            cost_estimate=cost,
        )(x2d, w1, b1, w2, b2, gamma, beta)
    else:
        # ------------------ streamed path: tile the inner dim ------------------
        if inner_tile is not None:
            tI = inner_tile
        else:
            tI = None
            for cand in cfg["inner_tiles"]:
                if I % cand == 0:          # prefer exact divisor -> no weight pad
                    tI = cand
                    break
            if tI is None:
                tI = cfg["inner_tiles"][0]
        tI = _round_up(min(tI, _round_up(I, 128)), 128)
        i_pad = _round_up(I, tI)
        if i_pad != I:
            # TODO(synk): pre-pad weights once outside jit to avoid per-call HBM copies.
            w1 = jnp.pad(w1, ((0, 0), (0, i_pad - I)))
            b1 = jnp.pad(b1, ((0, 0), (0, i_pad - I)))
            w2 = jnp.pad(w2, ((0, i_pad - I), (0, 0)))

        grid = (n_row_tiles, i_pad // tI)

        stream_bytes = (4 * rt * D * xb       # x + out double buffers
                        + 4 * D * tI * wb     # w1 + w2 chunk double buffers
                        + 4 * rt * D          # f32 accumulator scratch
                        + 6 * rt * tI         # h temporaries
                        + 8 * (D + tI) * wb)  # biases / LN params
        vmem_limit = min(cfg["vmem_cap"],
                         max(32 << 20, int(stream_bytes * 1.25)))
        cost = pl.CostEstimate(
            flops=int(4 * n_pad * D * i_pad),
            transcendentals=int(n_pad * i_pad),
            bytes_accessed=int(
                2 * n_pad * D * xb                              # x in + out
                + n_row_tiles * 2 * D * i_pad * wb              # weights re-streamed
                + (i_pad + 3 * D) * wb),
        )
        out = pl.pallas_call(
            _ffn_kernel_stream,
            out_shape=jax.ShapeDtypeStruct((n_pad, D), x.dtype),
            grid_spec=pltpu.PrefetchScalarGridSpec(
                num_scalar_prefetch=0,
                grid=grid,
                in_specs=[
                    pl.BlockSpec((rt, D), lambda i, k: (i, 0)),   # x rows (held across k)
                    pl.BlockSpec((D, tI), lambda i, k: (0, k)),   # w1 inner chunk
                    pl.BlockSpec((1, tI), lambda i, k: (0, k)),   # b1 inner chunk
                    pl.BlockSpec((tI, D), lambda i, k: (k, 0)),   # w2 inner chunk
                    pl.BlockSpec((1, D), lambda i, k: (0, 0)),    # b2
                    pl.BlockSpec((1, D), lambda i, k: (0, 0)),    # gamma
                    pl.BlockSpec((1, D), lambda i, k: (0, 0)),    # beta
                ],
                out_specs=pl.BlockSpec((rt, D), lambda i, k: (i, 0)),
                scratch_shapes=[pltpu.VMEM((rt, D), jnp.float32)],
            ),
            compiler_params=pltpu.CompilerParams(
                dimension_semantics=("parallel", "arbitrary"),
                vmem_limit_bytes=vmem_limit),
            cost_estimate=cost,
        )(x2d, w1, b1, w2, b2, gamma, beta)

    if n_pad != N:
        out = out[:N]
    return out.reshape(B, S, D)


# --------------------------------------------------------------------------
# Params / reference / demo
# --------------------------------------------------------------------------
def init_params(key, d_model, inner_size, dtype=jnp.float32):
    """Deterministic synthetic params matching nn.Linear / nn.LayerNorm shapes."""
    k1, k2, k3, k4 = jax.random.split(key, 4)
    lim1 = 1.0 / math.sqrt(d_model)
    lim2 = 1.0 / math.sqrt(inner_size)
    w1 = jax.random.uniform(k1, (d_model, inner_size), dtype, -lim1, lim1)
    b1 = jax.random.uniform(k2, (1, inner_size), dtype, -lim1, lim1)
    w2 = jax.random.uniform(k3, (inner_size, d_model), dtype, -lim2, lim2)
    b2 = jax.random.uniform(k4, (1, d_model), dtype, -lim2, lim2)
    gamma = jnp.ones((1, d_model), dtype)
    beta = jnp.zeros((1, d_model), dtype)
    return (w1, b1, w2, b2, gamma, beta)


def _reference(x, params):
    """Plain-JAX reference for sanity checking."""
    w1, b1, w2, b2, gamma, beta = params
    h = x.astype(jnp.float32) @ w1.astype(jnp.float32) + b1.astype(jnp.float32)
    h = 0.5 * h * (1.0 + jax.lax.erf(h / jnp.sqrt(2.0)))
    y = h @ w2.astype(jnp.float32) + b2.astype(jnp.float32) + x.astype(jnp.float32)
    mean = jnp.mean(y, axis=-1, keepdims=True)
    var = jnp.mean((y - mean) ** 2, axis=-1, keepdims=True)
    out = (y - mean) * jax.lax.rsqrt(var + _LN_EPS) * gamma + beta
    return out.astype(x.dtype)


if __name__ == "__main__":
    key = jax.random.PRNGKey(0)
    kx, kp = jax.random.split(key)

    # Small lane-dense demo shapes (D multiple of 128).
    B, S, D, INNER = 2, 8, 128, 256
    x = jax.random.normal(kx, (B, S, D), jnp.float32)
    params = init_params(kp, D, INNER)

    ref = _reference(x, params)

    # Fast path: full weights VMEM-resident, single row-parallel grid axis.
    out_res = jax.block_until_ready(feed_forward(x, params, mode="resident"))
    assert out_res.shape == (B, S, D)
    assert jnp.allclose(out_res, ref, atol=1e-4, rtol=1e-4), "resident path mismatch"

    # Streamed path: force it (inner_tile=128 -> 2 inner chunks) so the
    # accumulation + pl.when init/finalize path is also exercised.
    out_str = jax.block_until_ready(
        feed_forward(x, params, mode="stream", inner_tile=128))
    assert out_str.shape == (B, S, D)
    assert jnp.allclose(out_str, ref, atol=1e-4, rtol=1e-4), "streamed path mismatch"

    print("KERNEL_OK")
</pallas_src>

<mosaic_0001>
module attributes {stable_mosaic.version = 11 : i64} {
  func.func @_ffn_kernel_resident(%arg0: i32, %arg1: memref<128x128xf32, #tpu.memory_space<vmem>>, %arg2: memref<128x256xf32, #tpu.memory_space<vmem>>, %arg3: memref<1x256xf32, #tpu.memory_space<vmem>>, %arg4: memref<256x128xf32, #tpu.memory_space<vmem>>, %arg5: memref<1x128xf32, #tpu.memory_space<vmem>>, %arg6: memref<1x128xf32, #tpu.memory_space<vmem>>, %arg7: memref<1x128xf32, #tpu.memory_space<vmem>>, %arg8: memref<128x128xf32, #tpu.memory_space<vmem>>) attributes {dimension_semantics = [#tpu.dimension_semantics<parallel>], iteration_bounds = array<i64: 1>, scalar_prefetch = 0 : i64, scratch_operands = 0 : i64, tpu.core_type = #tpu.core_type<tc>, window_params = [{transform_indices = @transform_0, window_bounds = array<i64: 128, 128>}, {pipeline_mode = #tpu.pipeline_mode<synchronous>, transform_indices = @transform_1, window_bounds = array<i64: 128, 256>}, {pipeline_mode = #tpu.pipeline_mode<synchronous>, transform_indices = @transform_2, window_bounds = array<i64: 1, 256>}, {pipeline_mode = #tpu.pipeline_mode<synchronous>, transform_indices = @transform_3, window_bounds = array<i64: 256, 128>}, {pipeline_mode = #tpu.pipeline_mode<synchronous>, transform_indices = @transform_4, window_bounds = array<i64: 1, 128>}, {pipeline_mode = #tpu.pipeline_mode<synchronous>, transform_indices = @transform_5, window_bounds = array<i64: 1, 128>}, {pipeline_mode = #tpu.pipeline_mode<synchronous>, transform_indices = @transform_6, window_bounds = array<i64: 1, 128>}, {transform_indices = @transform_7, window_bounds = array<i64: 128, 128>}]} {
    %c0 = arith.constant 0 : index
    %c0_0 = arith.constant 0 : index
    %0 = vector.load %arg1[%c0, %c0_0] : memref<128x128xf32, #tpu.memory_space<vmem>>, vector<128x128xf32>
    %c0_1 = arith.constant 0 : index
    %c0_2 = arith.constant 0 : index
    %1 = vector.load %arg2[%c0_1, %c0_2] : memref<128x256xf32, #tpu.memory_space<vmem>>, vector<128x256xf32>
    %cst = arith.constant dense<0.000000e+00> : vector<128x256xf32>
    %2 = tpu.matmul %0, %1, %cst {dimension_numbers = #tpu.dot_dimension_numbers<[1], [0], [0], [1], [0, 0, 1, 1], [], []>} : vector<128x128xf32>, vector<128x256xf32>, vector<128x256xf32> -> vector<128x256xf32>
    %c0_3 = arith.constant 0 : index
    %c0_4 = arith.constant 0 : index
    %3 = vector.load %arg3[%c0_3, %c0_4] : memref<1x256xf32, #tpu.memory_space<vmem>>, vector<1x256xf32>
    %4 = vector.broadcast %3 : vector<1x256xf32> to vector<128x256xf32>
    %5 = arith.addf %2, %4 : vector<128x256xf32>
    %cst_5 = arith.constant 5.000000e-01 : f32
    %6 = vector.broadcast %cst_5 : f32 to vector<128x256xf32>
    %7 = arith.mulf %6, %5 : vector<128x256xf32>
    %cst_6 = arith.constant 0.707106769 : f32
    %8 = vector.broadcast %cst_6 : f32 to vector<128x256xf32>
    %9 = arith.mulf %5, %8 : vector<128x256xf32>
    %10 = math.erf %9 : vector<128x256xf32>
    %cst_7 = arith.constant 1.000000e+00 : f32
    %11 = vector.broadcast %cst_7 : f32 to vector<128x256xf32>
    %12 = arith.addf %11, %10 : vector<128x256xf32>
    %13 = arith.mulf %7, %12 : vector<128x256xf32>
    %c0_8 = arith.constant 0 : index
    %c0_9 = arith.constant 0 : index
    %14 = vector.load %arg4[%c0_8, %c0_9] : memref<256x128xf32, #tpu.memory_space<vmem>>, vector<256x128xf32>
    %cst_10 = arith.constant dense<0.000000e+00> : vector<128x128xf32>
    %15 = tpu.matmul %13, %14, %cst_10 {dimension_numbers = #tpu.dot_dimension_numbers<[1], [0], [0], [1], [0, 0, 1, 1], [], []>} : vector<128x256xf32>, vector<256x128xf32>, vector<128x128xf32> -> vector<128x128xf32>
    %c0_11 = arith.constant 0 : index
    %c0_12 = arith.constant 0 : index
    %16 = vector.load %arg5[%c0_11, %c0_12] : memref<1x128xf32, #tpu.memory_space<vmem>>, vector<1x128xf32>
    %17 = vector.broadcast %16 : vector<1x128xf32> to vector<128x128xf32>
    %18 = arith.addf %15, %17 : vector<128x128xf32>
    %19 = arith.addf %18, %0 : vector<128x128xf32>
    %c0_13 = arith.constant 0 : index
    %c0_14 = arith.constant 0 : index
    %20 = vector.load %arg6[%c0_13, %c0_14] : memref<1x128xf32, #tpu.memory_space<vmem>>, vector<1x128xf32>
    %c0_15 = arith.constant 0 : index
    %c0_16 = arith.constant 0 : index
    %21 = vector.load %arg7[%c0_15, %c0_16] : memref<1x128xf32, #tpu.memory_space<vmem>>, vector<1x128xf32>
    %cst_17 = arith.constant dense<0.000000e+00> : vector<128xf32>
    %22 = vector.multi_reduction <add>, %19, %cst_17 [1] : vector<128x128xf32> to vector<128xf32>
    %23 = vector.shape_cast %22 : vector<128xf32> to vector<128x1xf32>
    %cst_18 = arith.constant 1.280000e+02 : f32
    %24 = vector.broadcast %cst_18 : f32 to vector<128x1xf32>
    %25 = arith.divf %23, %24 : vector<128x1xf32>
    %26 = vector.broadcast %25 : vector<128x1xf32> to vector<128x128xf32>
    %27 = arith.subf %19, %26 : vector<128x128xf32>
    %28 = arith.mulf %27, %27 : vector<128x128xf32>
    %cst_19 = arith.constant dense<0.000000e+00> : vector<128xf32>
    %29 = vector.multi_reduction <add>, %28, %cst_19 [1] : vector<128x128xf32> to vector<128xf32>
    %30 = vector.shape_cast %29 : vector<128xf32> to vector<128x1xf32>
    %cst_20 = arith.constant 1.280000e+02 : f32
    %31 = vector.broadcast %cst_20 : f32 to vector<128x1xf32>
    %32 = arith.divf %30, %31 : vector<128x1xf32>
    %cst_21 = arith.constant 0.000000e+00 : f32
    %33 = vector.broadcast %cst_21 : f32 to vector<128x1xf32>
    %34 = arith.maximumf %32, %33 : vector<128x1xf32>
    %cst_22 = arith.constant 9.99999996E-13 : f32
    %35 = vector.broadcast %cst_22 : f32 to vector<128x1xf32>
    %36 = arith.addf %34, %35 : vector<128x1xf32>
    %37 = math.rsqrt %36 : vector<128x1xf32>
    %38 = vector.broadcast %37 : vector<128x1xf32> to vector<128x128xf32>
    %39 = arith.mulf %27, %38 : vector<128x128xf32>
    %40 = vector.broadcast %20 : vector<1x128xf32> to vector<128x128xf32>
    %41 = arith.mulf %39, %40 : vector<128x128xf32>
    %42 = vector.broadcast %21 : vector<1x128xf32> to vector<128x128xf32>
    %43 = arith.addf %41, %42 : vector<128x128xf32>
    %c0_23 = arith.constant 0 : index
    %c0_24 = arith.constant 0 : index
    %44 = vector.load %arg8[%c0_23, %c0_24] : memref<128x128xf32, #tpu.memory_space<vmem>>, vector<128x128xf32>
    tpu.vector_store %arg8[%c0_23, %c0_24], %43 {strides = array<i32>} : memref<128x128xf32, #tpu.memory_space<vmem>>, vector<128x128xf32>,
    return
  }
  func.func @transform_0(%arg0: i32) -> (i32, i32) {
    %c0_i32 = arith.constant 0 : i32
    %c0_i32_0 = arith.constant 0 : i32
    return %arg0, %c0_i32 : i32, i32
  }
  func.func @transform_1(%arg0: i32) -> (i32, i32) {
    %c0_i32 = arith.constant 0 : i32
    %c0_i32_0 = arith.constant 0 : i32
    %c0_i32_1 = arith.constant 0 : i32
    return %c0_i32, %c0_i32_0 : i32, i32
  }
  func.func @transform_2(%arg0: i32) -> (i32, i32) {
    %c0_i32 = arith.constant 0 : i32
    %c0_i32_0 = arith.constant 0 : i32
    %c0_i32_1 = arith.constant 0 : i32
    return %c0_i32, %c0_i32_0 : i32, i32
  }
  func.func @transform_3(%arg0: i32) -> (i32, i32) {
    %c0_i32 = arith.constant 0 : i32
    %c0_i32_0 = arith.constant 0 : i32
    %c0_i32_1 = arith.constant 0 : i32
    return %c0_i32, %c0_i32_0 : i32, i32
  }
  func.func @transform_4(%arg0: i32) -> (i32, i32) {
    %c0_i32 = arith.constant 0 : i32
    %c0_i32_0 = arith.constant 0 : i32
    %c0_i32_1 = arith.constant 0 : i32
    return %c0_i32, %c0_i32_0 : i32, i32
  }
  func.func @transform_5(%arg0: i32) -> (i32, i32) {
    %c0_i32 = arith.constant 0 : i32
    %c0_i32_0 = arith.constant 0 : i32
    %c0_i32_1 = arith.constant 0 : i32
    return %c0_i32, %c0_i32_0 : i32, i32
  }
  func.func @transform_6(%arg0: i32) -> (i32, i32) {
    %c0_i32 = arith.constant 0 : i32
    %c0_i32_0 = arith.constant 0 : i32
    %c0_i32_1 = arith.constant 0 : i32
    return %c0_i32, %c0_i32_0 : i32, i32
  }
  func.func @transform_7(%arg0: i32) -> (i32, i32) {
    %c0_i32 = arith.constant 0 : i32
    %c0_i32_0 = arith.constant 0 : i32
    return %arg0, %c0_i32 : i32, i32
  }
}

</mosaic_0001>

<llo_original>
// kernel: tpu_custom_call.1
$region0: #{tpu_custom_call.1}
  #allocation0 [shape = 'u32[]', space=smem, size = 0x4, offset = 0x4, fixed_abs, tag = 'smem constant byte address 0x4 - core index']
  #allocation1 [shape = 'u32[144,128]{1,0:T(1,128)}', space=vmem, size = 0x12000, scoped, tag = 'internal scratch']
  %s0 = inlined_call_operand.hbm [shape: f32[128,128], index: 0, kind: input, shape index: {}]
  %s1 = inlined_call_operand.hbm [shape: f32[128,256], index: 1, kind: input, shape index: {}]
  %s2 = inlined_call_operand.vmem [shape: f32[1,256], index: 2, kind: input, shape index: {}]
  %s3 = inlined_call_operand.hbm [shape: f32[256,128], index: 3, kind: input, shape index: {}]
  %s4 = inlined_call_operand.vmem [shape: f32[1,128], index: 4, kind: input, shape index: {}]
  %s5 = inlined_call_operand.vmem [shape: f32[1,128], index: 5, kind: input, shape index: {}]
  %s6 = inlined_call_operand.vmem [shape: f32[1,128], index: 6, kind: input, shape index: {}]
  %s7 = inlined_call_operand.hbm [shape: f32[128,128], index: 7, kind: output, shape index: {}]
  %s8 = sld [smem:[#allocation0]]
  $region50: #{tpu_custom_call.1} parent=0
    _
  %s10 = ssub.s32 1, %s8
  %s11 = scalar_select 0, %s10, %s8
  $region1: #{tpu_custom_call.1} parent=0
    #allocation2 [shape = 'u8[65536]{0}', space=vmem, size = 0x10000, scoped, tag = 'input window, operand 0, single buffered']
    #allocation3 [shape = 's32[1]{0}', space=sflag, size = 0x4, scoped, tag = 'scoped memory for tpu_custom_call.1']
    #allocation4 [shape = 's32[1]{0}', space=sflag, size = 0x4, scoped, tag = 'scoped memory for tpu_custom_call.1']
    #allocation5 [shape = 'u8[131072]{0}', space=vmem, size = 0x20000, scoped, tag = 'input window, operand 1, single buffered']
    #allocation6 [shape = 's32[1]{0}', space=sflag, size = 0x4, scoped, tag = 'scoped memory for tpu_custom_call.1']
    #allocation7 [shape = 'u8[131072]{0}', space=vmem, size = 0x20000, scoped, tag = 'input window, operand 3, single buffered']
    #allocation8 [shape = 'u8[65536]{0}', space=vmem, size = 0x10000, scoped, tag = 'output window, operand 0, single buffered']
    %12 = vsyncpa [#allocation3], 0
    %13 = vsyncpa [#allocation6], 0
    %14 = vsyncpa [#allocation4], 0
    // Predicated region
    $region2: #{tpu_custom_call.1} parent=1 // pred_check
      _
    $region3: #{tpu_custom_call.1} parent=1 // pred_check_branch
      %16 = sbr.rel (0) target = $region5
    $region4: #{tpu_custom_call.1} parent=1 // pred_region
      %s18 = ssub.s32 2048, 2048
      %19 = vsyncadd [#allocation3], %s18
      %s20 = sshll.u32 [#allocation2], 4
      %s21 = int_to_ptr.vmem [resolvable:$true] %s20
      %26 = dma.hbm_to_vmem [thread:$0]  %s0, 2048, %s21, [#allocation3], 128, 128, 8
    $region5: #{tpu_custom_call.1} parent=1 // pred_fallthru
      _
    // Predicated region
    $region6: #{tpu_custom_call.1} parent=1 // pred_check
      _
    $region7: #{tpu_custom_call.1} parent=1 // pred_check_branch
      %28 = sbr.rel (0) target = $region9
    $region8: #{tpu_custom_call.1} parent=1 // pred_region
      %s30 = ssub.s32 4096, 4096
      %31 = vsyncadd [#allocation6], %s30
      %s32 = sshll.u32 [#allocation5], 4
      %s33 = int_to_ptr.vmem [resolvable:$true] %s32
      %38 = dma.hbm_to_vmem [thread:$0]  %s1, 4096, %s33, [#allocation6], 256, 256, 16
    $region9: #{tpu_custom_call.1} parent=1 // pred_fallthru
      _
    // Predicated region
    $region10: #{tpu_custom_call.1} parent=1 // pred_check
      _
    $region11: #{tpu_custom_call.1} parent=1 // pred_check_branch
      %40 = sbr.rel (0) target = $region13
    $region12: #{tpu_custom_call.1} parent=1 // pred_region
      _
    $region13: #{tpu_custom_call.1} parent=1 // pred_fallthru
      _
    // Predicated region
    $region14: #{tpu_custom_call.1} parent=1 // pred_check
      _
    $region15: #{tpu_custom_call.1} parent=1 // pred_check_branch
      %42 = sbr.rel (0) target = $region17
    $region16: #{tpu_custom_call.1} parent=1 // pred_region
      %s44 = ssub.s32 4096, 4096
      %45 = vsyncadd [#allocation6], %s44
      %s46 = sshll.u32 [#allocation7], 4
      %s47 = int_to_ptr.vmem [resolvable:$true] %s46
      %52 = dma.hbm_to_vmem [thread:$0]  %s3, 4096, %s47, [#allocation6], 128, 128, 8
    $region17: #{tpu_custom_call.1} parent=1 // pred_fallthru
      _
    // Predicated region
    $region18: #{tpu_custom_call.1} parent=1 // pred_check
      _
    $region19: #{tpu_custom_call.1} parent=1 // pred_check_branch
      %54 = sbr.rel (0) target = $region21
    $region20: #{tpu_custom_call.1} parent=1 // pred_region
      _
    $region21: #{tpu_custom_call.1} parent=1 // pred_fallthru
      _
    // Predicated region
    $region22: #{tpu_custom_call.1} parent=1 // pred_check
      _
    $region23: #{tpu_custom_call.1} parent=1 // pred_check_branch
      %56 = sbr.rel (0) target = $region25
    $region24: #{tpu_custom_call.1} parent=1 // pred_region
      _
    $region25: #{tpu_custom_call.1} parent=1 // pred_fallthru
      _
    // Predicated region
    $region26: #{tpu_custom_call.1} parent=1 // pred_check
      _
    $region27: #{tpu_custom_call.1} parent=1 // pred_check_branch
      %58 = sbr.rel (0) target = $region29
    $region28: #{tpu_custom_call.1} parent=1 // pred_region
      _
    $region29: #{tpu_custom_call.1} parent=1 // pred_fallthru
      _
    // Predicated region
    $region30: #{tpu_custom_call.1} parent=1 // pred_check
      _
    $region31: #{tpu_custom_call.1} parent=1 // pred_check_branch
      %60 = sbr.rel (0) target = $region33
    $region32: #{tpu_custom_call.1} parent=1 // pred_region
      %61 = dma.done [#allocation3], 2048
    $region33: #{tpu_custom_call.1} parent=1 // pred_fallthru
      _
    // Predicated region
    $region34: #{tpu_custom_call.1} parent=1 // pred_check
      _
    $region35: #{tpu_custom_call.1} parent=1 // pred_check_branch
      %63 = sbr.rel (0) target = $region37
    $region36: #{tpu_custom_call.1} parent=1 // pred_region
      %64 = dma.done [#allocation6], 4096
    $region37: #{tpu_custom_call.1} parent=1 // pred_fallthru
      _
    // Predicated region
    $region38: #{tpu_custom_call.1} parent=1 // pred_check
      _
    $region39: #{tpu_custom_call.1} parent=1 // pred_check_branch
      %66 = sbr.rel (0) target = $region41
    $region40: #{tpu_custom_call.1} parent=1 // pred_region
      %67 = dma.done [#allocation6], 4096
    $region41: #{tpu_custom_call.1} parent=1 // pred_fallthru
      _
    %v68 = vld [vmem:[#allocation2] sm:$0xff]
    %v69 = vld [vmem:[#allocation2 + $0x8] sm:$0xff]
    %v70 = vld [vmem:[#allocation2 + $0x10] sm:$0xff]
    %v71 = vld [vmem:[#allocation2 + $0x18] sm:$0xff]
    %v72 = vld [vmem:[#allocation2 + $0x20] sm:$0xff]
    %v73 = vld [vmem:[#allocation2 + $0x28] sm:$0xff]
    %v74 = vld [vmem:[#allocation2 + $0x30] sm:$0xff]
    %v75 = vld [vmem:[#allocation2 + $0x38] sm:$0xff]
    %v76 = vld [vmem:[#allocation2 + $0x40] sm:$0xff]
    %v77 = vld [vmem:[#allocation2 + $0x48] sm:$0xff]
    %v78 = vld [vmem:[#allocation2 + $0x50] sm:$0xff]
    %v79 = vld [vmem:[#allocation2 + $0x58] sm:$0xff]
    %v80 = vld [vmem:[#allocation2 + $0x60] sm:$0xff]
    %v81 = vld [vmem:[#allocation2 + $0x68] sm:$0xff]
    %v82 = vld [vmem:[#allocation2 + $0x70] sm:$0xff]
    %v83 = vld [vmem:[#allocation2 + $0x78] sm:$0xff]
    %v84 = vld [vmem:[#allocation5] sm:$0xff]
    %v85 = vld [vmem:[#allocation5 + $0x8] sm:$0xff]
    %v86 = vld [vmem:[#allocation5 + $0x10] sm:$0xff]
    %v87 = vld [vmem:[#allocation5 + $0x18] sm:$0xff]
    %v88 = vld [vmem:[#allocation5 + $0x20] sm:$0xff]
    %v89 = vld [vmem:[#allocation5 + $0x28] sm:$0xff]
    %v90 = vld [vmem:[#allocation5 + $0x30] sm:$0xff]
    %v91 = vld [vmem:[#allocation5 + $0x38] sm:$0xff]
    %v92 = vld [vmem:[#allocation5 + $0x40] sm:$0xff]
    %v93 = vld [vmem:[#allocation5 + $0x48] sm:$0xff]
    %v94 = vld [vmem:[#allocation5 + $0x50] sm:$0xff]
    %v95 = vld [vmem:[#allocation5 + $0x58] sm:$0xff]
    %v96 = vld [vmem:[#allocation5 + $0x60] sm:$0xff]
    %v97 = vld [vmem:[#allocation5 + $0x68] sm:$0xff]
    %v98 = vld [vmem:[#allocation5 + $0x70] sm:$0xff]
    %v99 = vld [vmem:[#allocation5 + $0x78] sm:$0xff]
    %v100 = vld [vmem:[#allocation5 + $0x80] sm:$0xff]
    %v101 = vld [vmem:[#allocation5 + $0x88] sm:$0xff]
    %v102 = vld [vmem:[#allocation5 + $0x90] sm:$0xff]
    %v103 = vld [vmem:[#allocation5 + $0x98] sm:$0xff]
    %v104 = vld [vmem:[#allocation5 + $0xa0] sm:$0xff]
    %v105 = vld [vmem:[#allocation5 + $0xa8] sm:$0xff]
    %v106 = vld [vmem:[#allocation5 + $0xb0] sm:$0xff]
    %v107 = vld [vmem:[#allocation5 + $0xb8] sm:$0xff]
    %v108 = vld [vmem:[#allocation5 + $0xc0] sm:$0xff]
    %v109 = vld [vmem:[#allocation5 + $0xc8] sm:$0xff]
    %v110 = vld [vmem:[#allocation5 + $0xd0] sm:$0xff]
    %v111 = vld [vmem:[#allocation5 + $0xd8] sm:$0xff]
    %v112 = vld [vmem:[#allocation5 + $0xe0] sm:$0xff]
    %v113 = vld [vmem:[#allocation5 + $0xe8] sm:$0xff]
    %v114 = vld [vmem:[#allocation5 + $0xf0] sm:$0xff]
    %v115 = vld [vmem:[#allocation5 + $0xf8] sm:$0xff]
    %v116 = vld [vmem:[%s2] sm:$0x3]
    %v118 = vlaneseq
    %v119 = vshrl.u32 %v118, 7
    %v120 = vsub.s32 0, %v119
    %v121 = vrot.slane %v116, %v120
    %v122 = vlaneseq
    %v123 = vshrl.u32 %v122, 7
    %v124 = vsub.s32 1, %v123
    %v125 = vrot.slane %v116, %v124
    %128 = vmatprep.subr.mxu0 %v115
    %129 = vmatpush1.msra.mxu0 %v114
    %130 = vmatprep.subr.mxu0 %v113
    %131 = vmatpush1.msra.mxu0 %v112
    %132 = vmatprep.subr.mxu0 %v111
    %133 = vmatpush1.msra.mxu0 %v110
    %134 = vmatprep.subr.mxu0 %v109
    %135 = vmatpush1.msra.mxu0 %v108
    %136 = vmatprep.subr.mxu0 %v107
    %137 = vmatpush1.msra.mxu0 %v106
    %138 = vmatprep.subr.mxu0 %v105
    %139 = vmatpush1.msra.mxu0 %v104
    %140 = vmatprep.subr.mxu0 %v103
    %141 = vmatpush1.msra.mxu0 %v102
    %142 = vmatprep.subr.mxu0 %v101
    %143 = vmatpush1.msra.mxu0 %v100
    %144 = vmatprep.subr.mxu0 %v99
    %145 = vmatpush1.msra.mxu0 %v98
    %146 = vmatprep.subr.mxu0 %v97
    %147 = vmatpush1.msra.mxu0 %v96
    %148 = vmatprep.subr.mxu0 %v95
    %149 = vmatpush1.msra.mxu0 %v94
    %150 = vmatprep.subr.mxu0 %v93
    %151 = vmatpush1.msra.mxu0 %v92
    %152 = vmatprep.subr.mxu0 %v91
    %153 = vmatpush1.msra.mxu0 %v90
    %154 = vmatprep.subr.mxu0 %v89
    %155 = vmatpush1.msra.mxu0 %v88
    %156 = vmatprep.subr.mxu0 %v87
    %157 = vmatpush1.msra.mxu0 %v86
    %158 = vmatprep.subr.mxu0 %v85
    %159 = vmatpush1.msra.mxu0 %v84
    %160 = vmatprep.subr.mxu0 0.0
    %161 = vmatpush2.msra.mxu0 0.0
    %162 = vmatprep.subr.mxu0 0.0
    %163 = vmatpush2.msra.mxu0 0.0
    %164 = vmatprep.subr.mxu0 0.0
    %165 = vmatpush2.msra.mxu0 0.0
    %166 = vmatprep.subr.mxu0 0.0
    %167 = vmatpush2.msra.mxu0 0.0
    %168 = vmatprep.subr.mxu0 0.0
    %169 = vmatpush2.msra.mxu0 0.0
    %170 = vmatprep.subr.mxu0 0.0
    %171 = vmatpush2.msra.mxu0 0.0
    %172 = vmatprep.subr.mxu0 0.0
    %173 = vmatpush2.msra.mxu0 0.0
    %174 = vmatprep.subr.mxu0 0.0
    %175 = vmatpush2.msra.mxu0 0.0
    %176 = vmatprep.subr.mxu0 0.0
    %177 = vmatpush2.msra.mxu0 0.0
    %178 = vmatprep.subr.mxu0 0.0
    %179 = vmatpush2.msra.mxu0 0.0
    %180 = vmatprep.subr.mxu0 0.0
    %181 = vmatpush2.msra.mxu0 0.0
    %182 = vmatprep.subr.mxu0 0.0
    %183 = vmatpush2.msra.mxu0 0.0
    %184 = vmatprep.subr.mxu0 0.0
    %185 = vmatpush2.msra.mxu0 0.0
    %186 = vmatprep.subr.mxu0 0.0
    %187 = vmatpush2.msra.mxu0 0.0
    %188 = vmatprep.subr.mxu0 0.0
    %189 = vmatpush2.msra.mxu0 0.0
    %190 = vmatprep.subr.mxu0 0.0
    %191 = vmatpush2.msra.mxu0 0.0
    %192 = vmatprep.mubr.f32.mxu0 0.0
    %193 = vmatmul.mubr.f32.gmra.mxu0 %v68
    %v194 = vpop.f32.mrf.mxu0
    %v195 = vadd.f32 %v121, %v194
    %v196 = vpop.f32.mrf.mxu0
    %v197 = vadd.f32 %v125, %v196
    %198 = vmatprep.mubr.f32.mxu0 0.0
    %199 = vmatmul.mubr.f32.gmra.mxu0 %v69
    %v200 = vpop.f32.mrf.mxu0
    %v201 = vadd.f32 %v121, %v200
    %v202 = vpop.f32.mrf.mxu0
    %v203 = vadd.f32 %v125, %v202
    %204 = vmatprep.mubr.f32.mxu0 0.0
    %205 = vmatmul.mubr.f32.gmra.mxu0 %v70
    %v206 = vpop.f32.mrf.mxu0
    %v207 = vadd.f32 %v121, %v206
    %v208 = vpop.f32.mrf.mxu0
    %v209 = vadd.f32 %v125, %v208
    %210 = vmatprep.mubr.f32.mxu0 0.0
    %211 = vmatmul.mubr.f32.gmra.mxu0 %v71
    %v212 = vpop.f32.mrf.mxu0
    %v213 = vadd.f32 %v121, %v212
    %v214 = vpop.f32.mrf.mxu0
    %v215 = vadd.f32 %v125, %v214
    %216 = vmatprep.mubr.f32.mxu0 0.0
    %217 = vmatmul.mubr.f32.gmra.mxu0 %v72
    %v218 = vpop.f32.mrf.mxu0
    %v219 = vadd.f32 %v121, %v218
    %v220 = vpop.f32.mrf.mxu0
    %v221 = vadd.f32 %v125, %v220
    %222 = vmatprep.mubr.f32.mxu0 0.0
    %223 = vmatmul.mubr.f32.gmra.mxu0 %v73
    %v224 = vpop.f32.mrf.mxu0
    %v225 = vadd.f32 %v121, %v224
    %v226 = vpop.f32.mrf.mxu0
    %v227 = vadd.f32 %v125, %v226
    %228 = vmatprep.mubr.f32.mxu0 0.0
    %229 = vmatmul.mubr.f32.gmra.mxu0 %v74
    %v230 = vpop.f32.mrf.mxu0
    %v231 = vadd.f32 %v121, %v230
    %v232 = vpop.f32.mrf.mxu0
    %v233 = vadd.f32 %v125, %v232
    %234 = vmatprep.mubr.f32.mxu0 0.0
    %235 = vmatmul.mubr.f32.gmra.mxu0 %v75
    %v236 = vpop.f32.mrf.mxu0
    %v237 = vadd.f32 %v121, %v236
    %v238 = vpop.f32.mrf.mxu0
    %v239 = vadd.f32 %v125, %v238
    %240 = vmatprep.mubr.f32.mxu0 0.0
    %241 = vmatmul.mubr.f32.gmra.mxu0 %v76
    %v242 = vpop.f32.mrf.mxu0
    %v243 = vadd.f32 %v121, %v242
    %v244 = vpop.f32.mrf.mxu0
    %v245 = vadd.f32 %v125, %v244
    %246 = vmatprep.mubr.f32.mxu0 0.0
    %247 = vmatmul.mubr.f32.gmra.mxu0 %v77
    %v248 = vpop.f32.mrf.mxu0
    %v249 = vadd.f32 %v121, %v248
    %v250 = vpop.f32.mrf.mxu0
    %v251 = vadd.f32 %v125, %v250
    %252 = vmatprep.mubr.f32.mxu0 0.0
    %253 = vmatmul.mubr.f32.gmra.mxu0 %v78
    %v254 = vpop.f32.mrf.mxu0
    %v255 = vadd.f32 %v121, %v254
    %v256 = vpop.f32.mrf.mxu0
    %v257 = vadd.f32 %v125, %v256
    %258 = vmatprep.mubr.f32.mxu0 0.0
    %259 = vmatmul.mubr.f32.gmra.mxu0 %v79
    %v260 = vpop.f32.mrf.mxu0
    %v261 = vadd.f32 %v121, %v260
    %v262 = vpop.f32.mrf.mxu0
    %v263 = vadd.f32 %v125, %v262
    %264 = vmatprep.mubr.f32.mxu0 0.0
    %265 = vmatmul.mubr.f32.gmra.mxu0 %v80
    %v266 = vpop.f32.mrf.mxu0
    %v267 = vadd.f32 %v121, %v266
    %v268 = vpop.f32.mrf.mxu0
    %v269 = vadd.f32 %v125, %v268
    %270 = vmatprep.mubr.f32.mxu0 0.0
    %271 = vmatmul.mubr.f32.gmra.mxu0 %v81
    %v272 = vpop.f32.mrf.mxu0
    %v273 = vadd.f32 %v121, %v272
    %v274 = vpop.f32.mrf.mxu0
    %v275 = vadd.f32 %v125, %v274
    %276 = vmatprep.mubr.f32.mxu0 0.0
    %277 = vmatmul.mubr.f32.gmra.mxu0 %v82
    %v278 = vpop.f32.mrf.mxu0
    %v279 = vadd.f32 %v121, %v278
    %v280 = vpop.f32.mrf.mxu0
    %v281 = vadd.f32 %v125, %v280
    %282 = vmatprep.mubr.f32.mxu0 0.0
    %283 = vmatmul.mubr.f32.gmra.mxu0 %v83
    %v284 = vpop.f32.mrf.mxu0
    %v285 = vadd.f32 %v121, %v284
    %v286 = vpop.f32.mrf.mxu0
    %v287 = vadd.f32 %v125, %v286
    %288 = vdwg.mxu0
    %v289 = vmul.f32 %v195, 0.5
    %v290 = vmul.f32 %v197, 0.5
    %v291 = vmul.f32 %v201, 0.5
    %v292 = vmul.f32 %v203, 0.5
    %v293 = vmul.f32 %v207, 0.5
    %v294 = vmul.f32 %v209, 0.5
    %v295 = vmul.f32 %v213, 0.5
    %v296 = vmul.f32 %v215, 0.5
    %v297 = vmul.f32 %v219, 0.5
    %v298 = vmul.f32 %v221, 0.5
    %v299 = vmul.f32 %v225, 0.5
    %v300 = vmul.f32 %v227, 0.5
    %v301 = vmul.f32 %v231, 0.5
    %v302 = vmul.f32 %v233, 0.5
    %v303 = vmul.f32 %v237, 0.5
    %v304 = vmul.f32 %v239, 0.5
    %v305 = vmul.f32 %v243, 0.5
    %v306 = vmul.f32 %v245, 0.5
    %v307 = vmul.f32 %v249, 0.5
    %v308 = vmul.f32 %v251, 0.5
    %v309 = vmul.f32 %v255, 0.5
    %v310 = vmul.f32 %v257, 0.5
    %v311 = vmul.f32 %v261, 0.5
    %v312 = vmul.f32 %v263, 0.5
    %v313 = vmul.f32 %v267, 0.5
    %v314 = vmul.f32 %v269, 0.5
    %v315 = vmul.f32 %v273, 0.5
    %v316 = vmul.f32 %v275, 0.5
    %v317 = vmul.f32 %v279, 0.5
    %v318 = vmul.f32 %v281, 0.5
    %v319 = vmul.f32 %v285, 0.5
    %v320 = vmul.f32 %v287, 0.5
    %v321 = vmul.f32 %v195, 0.70710677
    %v322 = vmul.f32 %v197, 0.70710677
    %v323 = vmul.f32 %v201, 0.70710677
    %v324 = vmul.f32 %v203, 0.70710677
    %v325 = vmul.f32 %v207, 0.70710677
    %v326 = vmul.f32 %v209, 0.70710677
    %v327 = vmul.f32 %v213, 0.70710677
    %v328 = vmul.f32 %v215, 0.70710677
    %v329 = vmul.f32 %v219, 0.70710677
    %v330 = vmul.f32 %v221, 0.70710677
    %v331 = vmul.f32 %v225, 0.70710677
    %v332 = vmul.f32 %v227, 0.70710677
    %v333 = vmul.f32 %v231, 0.70710677
    %v334 = vmul.f32 %v233, 0.70710677
    %v335 = vmul.f32 %v237, 0.70710677
    %v336 = vmul.f32 %v239, 0.70710677
    %v337 = vmul.f32 %v243, 0.70710677
    %v338 = vmul.f32 %v245, 0.70710677
    %v339 = vmul.f32 %v249, 0.70710677
    %v340 = vmul.f32 %v251, 0.70710677
    %v341 = vmul.f32 %v255, 0.70710677
    %v342 = vmul.f32 %v257, 0.70710677
    %v343 = vmul.f32 %v261, 0.70710677
    %v344 = vmul.f32 %v263, 0.70710677
    %v345 = vmul.f32 %v267, 0.70710677
    %v346 = vmul.f32 %v269, 0.70710677
    %v347 = vmul.f32 %v273, 0.70710677
    %v348 = vmul.f32 %v275, 0.70710677
    %v349 = vmul.f32 %v279, 0.70710677
    %v350 = vmul.f32 %v281, 0.70710677
    %v351 = vmul.f32 %v285, 0.70710677
    %v352 = vmul.f32 %v287, 0.70710677
    %v353 = verf.f32.pop %v321
    %v354 = verf.f32.pop %v322
    %v355 = verf.f32.pop %v323
    %v356 = verf.f32.pop %v324
    %v357 = verf.f32.pop %v325
    %v358 = verf.f32.pop %v326
    %v359 = verf.f32.pop %v327
    %v360 = verf.f32.pop %v328
    %v361 = verf.f32.pop %v329
    %v362 = verf.f32.pop %v330
    %v363 = verf.f32.pop %v331
    %v364 = verf.f32.pop %v332
    %v365 = verf.f32.pop %v333
    %v366 = verf.f32.pop %v334
    %v367 = verf.f32.pop %v335
    %v368 = verf.f32.pop %v336
    %v369 = verf.f32.pop %v337
    %v370 = verf.f32.pop %v338
    %v371 = verf.f32.pop %v339
    %v372 = verf.f32.pop %v340
    %v373 = verf.f32.pop %v341
    %v374 = verf.f32.pop %v342
    %v375 = verf.f32.pop %v343
    %v376 = verf.f32.pop %v344
    %v377 = verf.f32.pop %v345
    %v378 = verf.f32.pop %v346
    %v379 = verf.f32.pop %v347
    %v380 = verf.f32.pop %v348
    %v381 = verf.f32.pop %v349
    %v382 = verf.f32.pop %v350
    %v383 = verf.f32.pop %v351
    %v384 = verf.f32.pop %v352
    %v385 = vadd.f32 %v353, 1.0
    %v386 = vadd.f32 %v354, 1.0
    %v387 = vadd.f32 %v355, 1.0
    %v388 = vadd.f32 %v356, 1.0
    %v389 = vadd.f32 %v357, 1.0
    %v390 = vadd.f32 %v358, 1.0
    %v391 = vadd.f32 %v359, 1.0
    %v392 = vadd.f32 %v360, 1.0
    %v393 = vadd.f32 %v361, 1.0
    %v394 = vadd.f32 %v362, 1.0
    %v395 = vadd.f32 %v363, 1.0
    %v396 = vadd.f32 %v364, 1.0
    %v397 = vadd.f32 %v365, 1.0
    %v398 = vadd.f32 %v366, 1.0
    %v399 = vadd.f32 %v367, 1.0
    %v400 = vadd.f32 %v368, 1.0
    %v401 = vadd.f32 %v369, 1.0
    %v402 = vadd.f32 %v370, 1.0
    %v403 = vadd.f32 %v371, 1.0
    %v404 = vadd.f32 %v372, 1.0
    %v405 = vadd.f32 %v373, 1.0
    %v406 = vadd.f32 %v374, 1.0
    %v407 = vadd.f32 %v375, 1.0
    %v408 = vadd.f32 %v376, 1.0
    %v409 = vadd.f32 %v377, 1.0
    %v410 = vadd.f32 %v378, 1.0
    %v411 = vadd.f32 %v379, 1.0
    %v412 = vadd.f32 %v380, 1.0
    %v413 = vadd.f32 %v381, 1.0
    %v414 = vadd.f32 %v382, 1.0
    %v415 = vadd.f32 %v383, 1.0
    %v416 = vadd.f32 %v384, 1.0
    %v417 = vmul.f32 %v289, %v385
    %v418 = vmul.f32 %v290, %v386
    %v419 = vmul.f32 %v291, %v387
    %v420 = vmul.f32 %v292, %v388
    %v421 = vmul.f32 %v293, %v389
    %v422 = vmul.f32 %v294, %v390
    %v423 = vmul.f32 %v295, %v391
    %v424 = vmul.f32 %v296, %v392
    %v425 = vmul.f32 %v297, %v393
    %v426 = vmul.f32 %v298, %v394
    %v427 = vmul.f32 %v299, %v395
    %v428 = vmul.f32 %v300, %v396
    %v429 = vmul.f32 %v301, %v397
    %v430 = vmul.f32 %v302, %v398
    %v431 = vmul.f32 %v303, %v399
    %v432 = vmul.f32 %v304, %v400
    %v433 = vmul.f32 %v305, %v401
    %v434 = vmul.f32 %v306, %v402
    %v435 = vmul.f32 %v307, %v403
    %v436 = vmul.f32 %v308, %v404
    %v437 = vmul.f32 %v309, %v405
    %v438 = vmul.f32 %v310, %v406
    %v439 = vmul.f32 %v311, %v407
    %v440 = vmul.f32 %v312, %v408
    %v441 = vmul.f32 %v313, %v409
    %v442 = vmul.f32 %v314, %v410
    %v443 = vmul.f32 %v315, %v411
    %v444 = vmul.f32 %v316, %v412
    %v445 = vmul.f32 %v317, %v413
    %v446 = vmul.f32 %v318, %v414
    %v447 = vmul.f32 %v319, %v415
    %v448 = vmul.f32 %v320, %v416
    %v449 = vld [vmem:[#allocation7] sm:$0xff]
    %v450 = vld [vmem:[#allocation7 + $0x8] sm:$0xff]
    %v451 = vld [vmem:[#allocation7 + $0x10] sm:$0xff]
    %v452 = vld [vmem:[#allocation7 + $0x18] sm:$0xff]
    %v453 = vld [vmem:[#allocation7 + $0x20] sm:$0xff]
    %v454 = vld [vmem:[#allocation7 + $0x28] sm:$0xff]
    %v455 = vld [vmem:[#allocation7 + $0x30] sm:$0xff]
    %v456 = vld [vmem:[#allocation7 + $0x38] sm:$0xff]
    %v457 = vld [vmem:[#allocation7 + $0x40] sm:$0xff]
    %v458 = vld [vmem:[#allocation7 + $0x48] sm:$0xff]
    %v459 = vld [vmem:[#allocation7 + $0x50] sm:$0xff]
    %v460 = vld [vmem:[#allocation7 + $0x58] sm:$0xff]
    %v461 = vld [vmem:[#allocation7 + $0x60] sm:$0xff]
    %v462 = vld [vmem:[#allocation7 + $0x68] sm:$0xff]
    %v463 = vld [vmem:[#allocation7 + $0x70] sm:$0xff]
    %v464 = vld [vmem:[#allocation7 + $0x78] sm:$0xff]
    %v465 = vld [vmem:[#allocation7 + $0x80] sm:$0xff]
    %v466 = vld [vmem:[#allocation7 + $0x88] sm:$0xff]
    %v467 = vld [vmem:[#allocation7 + $0x90] sm:$0xff]
    %v468 = vld [vmem:[#allocation7 + $0x98] sm:$0xff]
    %v469 = vld [vmem:[#allocation7 + $0xa0] sm:$0xff]
    %v470 = vld [vmem:[#allocation7 + $0xa8] sm:$0xff]
    %v471 = vld [vmem:[#allocation7 + $0xb0] sm:$0xff]
    %v472 = vld [vmem:[#allocation7 + $0xb8] sm:$0xff]
    %v473 = vld [vmem:[#allocation7 + $0xc0] sm:$0xff]
    %v474 = vld [vmem:[#allocation7 + $0xc8] sm:$0xff]
    %v475 = vld [vmem:[#allocation7 + $0xd0] sm:$0xff]
    %v476 = vld [vmem:[#allocation7 + $0xd8] sm:$0xff]
    %v477 = vld [vmem:[#allocation7 + $0xe0] sm:$0xff]
    %v478 = vld [vmem:[#allocation7 + $0xe8] sm:$0xff]
    %v479 = vld [vmem:[#allocation7 + $0xf0] sm:$0xff]
    %v480 = vld [vmem:[#allocation7 + $0xf8] sm:$0xff]
    %v481 = vld [vmem:[%s4] sm:$0x1]
    %v483 = vlaneseq
    %v484 = vshrl.u32 %v483, 7
    %v485 = vsub.s32 0, %v484
    %v486 = vrot.slane %v481, %v485
    %488 = vmatprep.subr.mxu0 0.0
    %489 = vmatpush1.msra.mxu0 %v464
    %490 = vmatprep.subr.mxu0 0.0
    %491 = vmatpush1.msra.mxu0 %v463
    %492 = vmatprep.subr.mxu0 0.0
    %493 = vmatpush1.msra.mxu0 %v462
    %494 = vmatprep.subr.mxu0 0.0
    %495 = vmatpush1.msra.mxu0 %v461
    %496 = vmatprep.subr.mxu0 0.0
    %497 = vmatpush1.msra.mxu0 %v460
    %498 = vmatprep.subr.mxu0 0.0
    %499 = vmatpush1.msra.mxu0 %v459
    %500 = vmatprep.subr.mxu0 0.0
    %501 = vmatpush1.msra.mxu0 %v458
    %502 = vmatprep.subr.mxu0 0.0
    %503 = vmatpush1.msra.mxu0 %v457
    %504 = vmatprep.subr.mxu0 0.0
    %505 = vmatpush1.msra.mxu0 %v456
    %506 = vmatprep.subr.mxu0 0.0
    %507 = vmatpush1.msra.mxu0 %v455
    %508 = vmatprep.subr.mxu0 0.0
    %509 = vmatpush1.msra.mxu0 %v454
    %510 = vmatprep.subr.mxu0 0.0
    %511 = vmatpush1.msra.mxu0 %v453
    %512 = vmatprep.subr.mxu0 0.0
    %513 = vmatpush1.msra.mxu0 %v452
    %514 = vmatprep.subr.mxu0 0.0
    %515 = vmatpush1.msra.mxu0 %v451
    %516 = vmatprep.subr.mxu0 0.0
    %517 = vmatpush1.msra.mxu0 %v450
    %518 = vmatprep.subr.mxu0 0.0
    %519 = vmatpush1.msra.mxu0 %v449
    %520 = vmatprep.subr.mxu0 0.0
    %521 = vmatpush2.msra.mxu0 %v480
    %522 = vmatprep.subr.mxu0 0.0
    %523 = vmatpush2.msra.mxu0 %v479
    %524 = vmatprep.subr.mxu0 0.0
    %525 = vmatpush2.msra.mxu0 %v478
    %526 = vmatprep.subr.mxu0 0.0
    %527 = vmatpush2.msra.mxu0 %v477
    %528 = vmatprep.subr.mxu0 0.0
    %529 = vmatpush2.msra.mxu0 %v476
    %530 = vmatprep.subr.mxu0 0.0
    %531 = vmatpush2.msra.mxu0 %v475
    %532 = vmatprep.subr.mxu0 0.0
    %533 = vmatpush2.msra.mxu0 %v474
    %534 = vmatprep.subr.mxu0 0.0
    %535 = vmatpush2.msra.mxu0 %v473
    %536 = vmatprep.subr.mxu0 0.0
    %537 = vmatpush2.msra.mxu0 %v472
    %538 = vmatprep.subr.mxu0 0.0
    %539 = vmatpush2.msra.mxu0 %v471
    %540 = vmatprep.subr.mxu0 0.0
    %541 = vmatpush2.msra.mxu0 %v470
    %542 = vmatprep.subr.mxu0 0.0
    %543 = vmatpush2.msra.mxu0 %v469
    %544 = vmatprep.subr.mxu0 0.0
    %545 = vmatpush2.msra.mxu0 %v468
    %546 = vmatprep.subr.mxu0 0.0
    %547 = vmatpush2.msra.mxu0 %v467
    %548 = vmatprep.subr.mxu0 0.0
    %549 = vmatpush2.msra.mxu0 %v466
    %550 = vmatprep.subr.mxu0 0.0
    %551 = vmatpush2.msra.mxu0 %v465
    %552 = vmatprep.mubr.f32.mxu0 %v418
    %553 = vmatmul.mubr.f32.gmra.mxu0 %v417
    %v554 = vpop.f32.mrf.mxu0
    %v555 = vadd.f32 %v486, %v554
    %v556 = vpop.f32.mrf.mxu0
    %557 = vmatprep.mubr.f32.mxu0 %v420
    %558 = vmatmul.mubr.f32.gmra.mxu0 %v419
    %v559 = vpop.f32.mrf.mxu0
    %v560 = vadd.f32 %v486, %v559
    %v561 = vpop.f32.mrf.mxu0
    %562 = vmatprep.mubr.f32.mxu0 %v422
    %563 = vmatmul.mubr.f32.gmra.mxu0 %v421
    %v564 = vpop.f32.mrf.mxu0
    %v565 = vadd.f32 %v486, %v564
    %v566 = vpop.f32.mrf.mxu0
    %567 = vmatprep.mubr.f32.mxu0 %v424
    %568 = vmatmul.mubr.f32.gmra.mxu0 %v423
    %v569 = vpop.f32.mrf.mxu0
    %v570 = vadd.f32 %v486, %v569
    %v571 = vpop.f32.mrf.mxu0
    %572 = vmatprep.mubr.f32.mxu0 %v426
    %573 = vmatmul.mubr.f32.gmra.mxu0 %v425
    %v574 = vpop.f32.mrf.mxu0
    %v575 = vadd.f32 %v486, %v574
    %v576 = vpop.f32.mrf.mxu0
    %577 = vmatprep.mubr.f32.mxu0 %v428
    %578 = vmatmul.mubr.f32.gmra.mxu0 %v427
    %v579 = vpop.f32.mrf.mxu0
    %v580 = vadd.f32 %v486, %v579
    %v581 = vpop.f32.mrf.mxu0
    %582 = vmatprep.mubr.f32.mxu0 %v430
    %583 = vmatmul.mubr.f32.gmra.mxu0 %v429
    %v584 = vpop.f32.mrf.mxu0
    %v585 = vadd.f32 %v486, %v584
    %v586 = vpop.f32.mrf.mxu0
    %587 = vmatprep.mubr.f32.mxu0 %v432
    %588 = vmatmul.mubr.f32.gmra.mxu0 %v431
    %v589 = vpop.f32.mrf.mxu0
    %v590 = vadd.f32 %v486, %v589
    %v591 = vpop.f32.mrf.mxu0
    %592 = vmatprep.mubr.f32.mxu0 %v434
    %593 = vmatmul.mubr.f32.gmra.mxu0 %v433
    %v594 = vpop.f32.mrf.mxu0
    %v595 = vadd.f32 %v486, %v594
    %v596 = vpop.f32.mrf.mxu0
    %597 = vmatprep.mubr.f32.mxu0 %v436
    %598 = vmatmul.mubr.f32.gmra.mxu0 %v435
    %v599 = vpop.f32.mrf.mxu0
    %v600 = vadd.f32 %v486, %v599
    %v601 = vpop.f32.mrf.mxu0
    %602 = vmatprep.mubr.f32.mxu0 %v438
    %603 = vmatmul.mubr.f32.gmra.mxu0 %v437
    %v604 = vpop.f32.mrf.mxu0
    %v605 = vadd.f32 %v486, %v604
    %v606 = vpop.f32.mrf.mxu0
    %607 = vmatprep.mubr.f32.mxu0 %v440
    %608 = vmatmul.mubr.f32.gmra.mxu0 %v439
    %v609 = vpop.f32.mrf.mxu0
    %v610 = vadd.f32 %v486, %v609
    %v611 = vpop.f32.mrf.mxu0
    %612 = vmatprep.mubr.f32.mxu0 %v442
    %613 = vmatmul.mubr.f32.gmra.mxu0 %v441
    %v614 = vpop.f32.mrf.mxu0
    %v615 = vadd.f32 %v486, %v614
    %v616 = vpop.f32.mrf.mxu0
    %617 = vmatprep.mubr.f32.mxu0 %v444
    %618 = vmatmul.mubr.f32.gmra.mxu0 %v443
    %v619 = vpop.f32.mrf.mxu0
    %v620 = vadd.f32 %v486, %v619
    %v621 = vpop.f32.mrf.mxu0
    %622 = vmatprep.mubr.f32.mxu0 %v446
    %623 = vmatmul.mubr.f32.gmra.mxu0 %v445
    %v624 = vpop.f32.mrf.mxu0
    %v625 = vadd.f32 %v486, %v624
    %v626 = vpop.f32.mrf.mxu0
    %627 = vmatprep.mubr.f32.mxu0 %v448
    %628 = vmatmul.mubr.f32.gmra.mxu0 %v447
    %v629 = vpop.f32.mrf.mxu0
    %v630 = vadd.f32 %v486, %v629
    %v631 = vpop.f32.mrf.mxu0
    %632 = vdwg.mxu0
    %v633 = vadd.f32 %v555, %v68
    %v634 = vadd.f32 %v560, %v69
    %v635 = vadd.f32 %v565, %v70
    %v636 = vadd.f32 %v570, %v71
    %v637 = vadd.f32 %v575, %v72
    %v638 = vadd.f32 %v580, %v73
    %v639 = vadd.f32 %v585, %v74
    %v640 = vadd.f32 %v590, %v75
    %v641 = vadd.f32 %v595, %v76
    %v642 = vadd.f32 %v600, %v77
    %v643 = vadd.f32 %v605, %v78
    %v644 = vadd.f32 %v610, %v79
    %v645 = vadd.f32 %v615, %v80
    %v646 = vadd.f32 %v620, %v81
    %v647 = vadd.f32 %v625, %v82
    %v648 = vadd.f32 %v630, %v83
    %v649 = vld [vmem:[%s5] sm:$0x1]
    %v650 = vld [vmem:[%s6] sm:$0x1]
    %651 = vadd.xlane.f32.xlu0 %v633
    %v652 = vpop.xlane.xlu0 %651
    %653 = vadd.xlane.f32.xlu0 %v634
    %v654 = vpop.xlane.xlu0 %653
    %655 = vadd.xlane.f32.xlu0 %v635
    %v656 = vpop.xlane.xlu0 %655
    %657 = vadd.xlane.f32.xlu0 %v636
    %v658 = vpop.xlane.xlu0 %657
    %659 = vadd.xlane.f32.xlu0 %v637
    %v660 = vpop.xlane.xlu0 %659
    %661 = vadd.xlane.f32.xlu0 %v638
    %v662 = vpop.xlane.xlu0 %661
    %663 = vadd.xlane.f32.xlu0 %v639
    %v664 = vpop.xlane.xlu0 %663
    %665 = vadd.xlane.f32.xlu0 %v640
    %v666 = vpop.xlane.xlu0 %665
    %667 = vadd.xlane.f32.xlu0 %v641
    %v668 = vpop.xlane.xlu0 %667
    %669 = vadd.xlane.f32.xlu0 %v642
    %v670 = vpop.xlane.xlu0 %669
    %671 = vadd.xlane.f32.xlu0 %v643
    %v672 = vpop.xlane.xlu0 %671
    %673 = vadd.xlane.f32.xlu0 %v644
    %v674 = vpop.xlane.xlu0 %673
    %675 = vadd.xlane.f32.xlu0 %v645
    %v676 = vpop.xlane.xlu0 %675
    %677 = vadd.xlane.f32.xlu0 %v646
    %v678 = vpop.xlane.xlu0 %677
    %679 = vadd.xlane.f32.xlu0 %v647
    %v680 = vpop.xlane.xlu0 %679
    %681 = vadd.xlane.f32.xlu0 %v648
    %v682 = vpop.xlane.xlu0 %681
    %v683 = vrcp.pop 128.0
    %v684 = vmul.f32 %v652, %v683
    %v685 = vmul.f32 %v654, %v683
    %v686 = vmul.f32 %v656, %v683
    %v687 = vmul.f32 %v658, %v683
    %v688 = vmul.f32 %v660, %v683
    %v689 = vmul.f32 %v662, %v683
    %v690 = vmul.f32 %v664, %v683
    %v691 = vmul.f32 %v666, %v683
    %v692 = vmul.f32 %v668, %v683
    %v693 = vmul.f32 %v670, %v683
    %v694 = vmul.f32 %v672, %v683
    %v695 = vmul.f32 %v674, %v683
    %v696 = vmul.f32 %v676, %v683
    %v697 = vmul.f32 %v678, %v683
    %v698 = vmul.f32 %v680, %v683
    %v699 = vmul.f32 %v682, %v683
    %v700 = vsub.f32 %v633, %v684
    %v701 = vsub.f32 %v634, %v685
    %v702 = vsub.f32 %v635, %v686
    %v703 = vsub.f32 %v636, %v687
    %v704 = vsub.f32 %v637, %v688
    %v705 = vsub.f32 %v638, %v689
    %v706 = vsub.f32 %v639, %v690
    %v707 = vsub.f32 %v640, %v691
    %v708 = vsub.f32 %v641, %v692
    %v709 = vsub.f32 %v642, %v693
    %v710 = vsub.f32 %v643, %v694
    %v711 = vsub.f32 %v644, %v695
    %v712 = vsub.f32 %v645, %v696
    %v713 = vsub.f32 %v646, %v697
    %v714 = vsub.f32 %v647, %v698
    %v715 = vsub.f32 %v648, %v699
    %v716 = vmul.f32 %v700, %v700
    %v717 = vmul.f32 %v701, %v701
    %v718 = vmul.f32 %v702, %v702
    %v719 = vmul.f32 %v703, %v703
    %v720 = vmul.f32 %v704, %v704
    %v721 = vmul.f32 %v705, %v705
    %v722 = vmul.f32 %v706, %v706
    %v723 = vmul.f32 %v707, %v707
    %v724 = vmul.f32 %v708, %v708
    %v725 = vmul.f32 %v709, %v709
    %v726 = vmul.f32 %v710, %v710
    %v727 = vmul.f32 %v711, %v711
    %v728 = vmul.f32 %v712, %v712
    %v729 = vmul.f32 %v713, %v713
    %v730 = vmul.f32 %v714, %v714
    %v731 = vmul.f32 %v715, %v715
    %732 = vadd.xlane.f32.xlu0 %v716
    %v733 = vpop.xlane.xlu0 %732
    %734 = vadd.xlane.f32.xlu0 %v717
    %v735 = vpop.xlane.xlu0 %734
    %736 = vadd.xlane.f32.xlu0 %v718
    %v737 = vpop.xlane.xlu0 %736
    %738 = vadd.xlane.f32.xlu0 %v719
    %v739 = vpop.xlane.xlu0 %738
    %740 = vadd.xlane.f32.xlu0 %v720
    %v741 = vpop.xlane.xlu0 %740
    %742 = vadd.xlane.f32.xlu0 %v721
    %v743 = vpop.xlane.xlu0 %742
    %744 = vadd.xlane.f32.xlu0 %v722
    %v745 = vpop.xlane.xlu0 %744
    %746 = vadd.xlane.f32.xlu0 %v723
    %v747 = vpop.xlane.xlu0 %746
    %748 = vadd.xlane.f32.xlu0 %v724
    %v749 = vpop.xlane.xlu0 %748
    %750 = vadd.xlane.f32.xlu0 %v725
    %v751 = vpop.xlane.xlu0 %750
    %752 = vadd.xlane.f32.xlu0 %v726
    %v753 = vpop.xlane.xlu0 %752
    %754 = vadd.xlane.f32.xlu0 %v727
    %v755 = vpop.xlane.xlu0 %754
    %756 = vadd.xlane.f32.xlu0 %v728
    %v757 = vpop.xlane.xlu0 %756
    %758 = vadd.xlane.f32.xlu0 %v729
    %v759 = vpop.xlane.xlu0 %758
    %760 = vadd.xlane.f32.xlu0 %v730
    %v761 = vpop.xlane.xlu0 %760
    %762 = vadd.xlane.f32.xlu0 %v731
    %v763 = vpop.xlane.xlu0 %762
    %v764 = vmul.f32 %v733, %v683
    %v765 = vmul.f32 %v735, %v683
    %v766 = vmul.f32 %v737, %v683
    %v767 = vmul.f32 %v739, %v683
    %v768 = vmul.f32 %v741, %v683
    %v769 = vmul.f32 %v743, %v683
    %v770 = vmul.f32 %v745, %v683
    %v771 = vmul.f32 %v747, %v683
    %v772 = vmul.f32 %v749, %v683
    %v773 = vmul.f32 %v751, %v683
    %v774 = vmul.f32 %v753, %v683
    %v775 = vmul.f32 %v755, %v683
    %v776 = vmul.f32 %v757, %v683
    %v777 = vmul.f32 %v759, %v683
    %v778 = vmul.f32 %v761, %v683
    %v779 = vmul.f32 %v763, %v683
    %v780 = vmax.f32 %v764, 0.0
    %v781 = vmax.f32 %v765, 0.0
    %v782 = vmax.f32 %v766, 0.0
    %v783 = vmax.f32 %v767, 0.0
    %v784 = vmax.f32 %v768, 0.0
    %v785 = vmax.f32 %v769, 0.0
    %v786 = vmax.f32 %v770, 0.0
    %v787 = vmax.f32 %v771, 0.0
    %v788 = vmax.f32 %v772, 0.0
    %v789 = vmax.f32 %v773, 0.0
    %v790 = vmax.f32 %v774, 0.0
    %v791 = vmax.f32 %v775, 0.0
    %v792 = vmax.f32 %v776, 0.0
    %v793 = vmax.f32 %v777, 0.0
    %v794 = vmax.f32 %v778, 0.0
    %v795 = vmax.f32 %v779, 0.0
    %v796 = vadd.f32 %v780, 1e-12
    %v797 = vadd.f32 %v781, 1e-12
    %v798 = vadd.f32 %v782, 1e-12
    %v799 = vadd.f32 %v783, 1e-12
    %v800 = vadd.f32 %v784, 1e-12
    %v801 = vadd.f32 %v785, 1e-12
    %v802 = vadd.f32 %v786, 1e-12
    %v803 = vadd.f32 %v787, 1e-12
    %v804 = vadd.f32 %v788, 1e-12
    %v805 = vadd.f32 %v789, 1e-12
    %v806 = vadd.f32 %v790, 1e-12
    %v807 = vadd.f32 %v791, 1e-12
    %v808 = vadd.f32 %v792, 1e-12
    %v809 = vadd.f32 %v793, 1e-12
    %v810 = vadd.f32 %v794, 1e-12
    %v811 = vadd.f32 %v795, 1e-12
    %v812 = vrsqrt.pop %v796
    %v813 = vrsqrt.pop %v797
    %v814 = vrsqrt.pop %v798
    %v815 = vrsqrt.pop %v799
    %v816 = vrsqrt.pop %v800
    %v817 = vrsqrt.pop %v801
    %v818 = vrsqrt.pop %v802
    %v819 = vrsqrt.pop %v803
    %v820 = vrsqrt.pop %v804
    %v821 = vrsqrt.pop %v805
    %v822 = vrsqrt.pop %v806
    %v823 = vrsqrt.pop %v807
    %v824 = vrsqrt.pop %v808
    %v825 = vrsqrt.pop %v809
    %v826 = vrsqrt.pop %v810
    %v827 = vrsqrt.pop %v811
    %v828 = vmul.f32 %v700, %v812
    %v829 = vmul.f32 %v701, %v813
    %v830 = vmul.f32 %v702, %v814
    %v831 = vmul.f32 %v703, %v815
    %v832 = vmul.f32 %v704, %v816
    %v833 = vmul.f32 %v705, %v817
    %v834 = vmul.f32 %v706, %v818
    %v835 = vmul.f32 %v707, %v819
    %v836 = vmul.f32 %v708, %v820
    %v837 = vmul.f32 %v709, %v821
    %v838 = vmul.f32 %v710, %v822
    %v839 = vmul.f32 %v711, %v823
    %v840 = vmul.f32 %v712, %v824
    %v841 = vmul.f32 %v713, %v825
    %v842 = vmul.f32 %v714, %v826
    %v843 = vmul.f32 %v715, %v827
    %v845 = vlaneseq
    %v846 = vshrl.u32 %v845, 7
    %v847 = vsub.s32 0, %v846
    %v848 = vrot.slane %v649, %v847
    %v850 = vmul.f32 %v828, %v848
    %v851 = vmul.f32 %v829, %v848
    %v852 = vmul.f32 %v830, %v848
    %v853 = vmul.f32 %v831, %v848
    %v854 = vmul.f32 %v832, %v848
    %v855 = vmul.f32 %v833, %v848
    %v856 = vmul.f32 %v834, %v848
    %v857 = vmul.f32 %v835, %v848
    %v858 = vmul.f32 %v836, %v848
    %v859 = vmul.f32 %v837, %v848
    %v860 = vmul.f32 %v838, %v848
    %v861 = vmul.f32 %v839, %v848
    %v862 = vmul.f32 %v840, %v848
    %v863 = vmul.f32 %v841, %v848
    %v864 = vmul.f32 %v842, %v848
    %v865 = vmul.f32 %v843, %v848
    %v867 = vlaneseq
    %v868 = vshrl.u32 %v867, 7
    %v869 = vsub.s32 0, %v868
    %v870 = vrot.slane %v650, %v869
    %v872 = vadd.f32 %v850, %v870
    %v873 = vadd.f32 %v851, %v870
    %v874 = vadd.f32 %v852, %v870
    %v875 = vadd.f32 %v853, %v870
    %v876 = vadd.f32 %v854, %v870
    %v877 = vadd.f32 %v855, %v870
    %v878 = vadd.f32 %v856, %v870
    %v879 = vadd.f32 %v857, %v870
    %v880 = vadd.f32 %v858, %v870
    %v881 = vadd.f32 %v859, %v870
    %v882 = vadd.f32 %v860, %v870
    %v883 = vadd.f32 %v861, %v870
    %v884 = vadd.f32 %v862, %v870
    %v885 = vadd.f32 %v863, %v870
    %v886 = vadd.f32 %v864, %v870
    %v887 = vadd.f32 %v865, %v870
    %888 = vst [vmem:[#allocation8] sm:$0xff] %v872
    %889 = vst [vmem:[#allocation8 + $0x8] sm:$0xff] %v873
    %890 = vst [vmem:[#allocation8 + $0x10] sm:$0xff] %v874
    %891 = vst [vmem:[#allocation8 + $0x18] sm:$0xff] %v875
    %892 = vst [vmem:[#allocation8 + $0x20] sm:$0xff] %v876
    %893 = vst [vmem:[#allocation8 + $0x28] sm:$0xff] %v877
    %894 = vst [vmem:[#allocation8 + $0x30] sm:$0xff] %v878
    %895 = vst [vmem:[#allocation8 + $0x38] sm:$0xff] %v879
    %896 = vst [vmem:[#allocation8 + $0x40] sm:$0xff] %v880
    %897 = vst [vmem:[#allocation8 + $0x48] sm:$0xff] %v881
    %898 = vst [vmem:[#allocation8 + $0x50] sm:$0xff] %v882
    %899 = vst [vmem:[#allocation8 + $0x58] sm:$0xff] %v883
    %900 = vst [vmem:[#allocation8 + $0x60] sm:$0xff] %v884
    %901 = vst [vmem:[#allocation8 + $0x68] sm:$0xff] %v885
    %902 = vst [vmem:[#allocation8 + $0x70] sm:$0xff] %v886
    %903 = vst [vmem:[#allocation8 + $0x78] sm:$0xff] %v887
    // Predicated region
    $region42: #{tpu_custom_call.1} parent=1 // pred_check
      _
    $region43: #{tpu_custom_call.1} parent=1 // pred_check_branch
      %905 = sbr.rel (0) target = $region45
    $region44: #{tpu_custom_call.1} parent=1 // pred_region
      %s907 = ssub.s32 2048, 2048
      %908 = vsyncadd [#allocation4], %s907
      %s909 = sshll.u32 [#allocation8], 4
      %s910 = int_to_ptr.vmem [resolvable:$true] %s909
      %915 = dma.vmem_to_hbm [thread:$0]  %s910, 2048, %s7, [#allocation4], 128, 128, 8
    $region45: #{tpu_custom_call.1} parent=1 // pred_fallthru
      _
    // Predicated region
    $region46: #{tpu_custom_call.1} parent=1 // pred_check
      _
    $region47: #{tpu_custom_call.1} parent=1 // pred_check_branch
      %917 = sbr.rel (0) target = $region49
    $region48: #{tpu_custom_call.1} parent=1 // pred_region
      %918 = dma.done [#allocation4], 2048
    $region49: #{tpu_custom_call.1} parent=1 // pred_fallthru
      _
    %919 = vsyncpa [#allocation3], 1
    %920 = vsyncpa [#allocation6], 1
    %921 = vsyncpa [#allocation4], 1

</llo_original>
